<compile_context>
chip_gen: v5e
topology: v5e:2x2
jax: 0.10.0
libtpu: 0.0.40
codegen_flags: <defaults>
</compile_context>

<pallas_src>
import jax
import jax.numpy as jnp
import numpy as np
from jax.experimental import pallas as pl
from jax.experimental.pallas import tpu as pltpu

# ----------------------- model hyper-parameters (small) -----------------------
IN_CHANNELS = 8
HIDDEN_LIST = (16, 16)
MLP_HIDDEN = 32
EDGE_CHANNELS = 4
NUM_CLASSES = 4
MAX_SIZE = 40.0
BN_EPS = 1e-5
LANE = 128


# --------------------------- parameter slab packing ---------------------------
def pack_params(named_segments):
    """Pack named 2-D f32 arrays row-wise into one [R, 128] slab.

    Each segment is zero-padded to 128 lanes and its row start is aligned to a
    multiple of 8 sublanes. Returns (slab, {name: (row_start, rows, cols)}).
    """
    rows, metas, off = [], {}, 0
    for name, seg in named_segments:
        r, c = seg.shape
        assert c <= LANE
        rows.append(jnp.pad(seg.astype(jnp.float32), ((0, 0), (0, LANE - c))))
        metas[name] = (off, r, c)
        pad = (-r) % 8
        if pad:
            rows.append(jnp.zeros((pad, LANE), jnp.float32))
        off += r + pad
    return jnp.concatenate(rows, axis=0), metas


# --------------------------------- kernel ------------------------------------
def make_kernel(meta, hidden_list, in_channels, edge_channels, n_nodes, num_graphs):
    Cin, Ce, N, G = in_channels, edge_channels, n_nodes, num_graphs

    def kernel(node_ref, ab_ref, param_ref, out_ref):
        # node_ref : [N, Cin+Ce+1] f32  = [x | Eagg | deg]
        # ab_ref   : [N+G, N]      bf16 = [A (adjacency + self loops) ; Bpool]
        # param_ref: [R, 128]      f32  packed parameter / per-graph-feature slab
        # out_ref  : [G, 128]      f32  lane-dense logits slab
        x = node_ref[:, 0:Cin]
        eagg = node_ref[:, Cin:Cin + Ce]
        deg = node_ref[:, Cin + Ce:Cin + Ce + 1]
        A = ab_ref[0:N, :]            # bf16, exact (entries in {0,1,2})
        Bpool = ab_ref[N:N + G, :]    # bf16, exact (one-hot)

        eagg_bf = eagg.astype(jnp.bfloat16)

        def get(name):
            off, r, c = meta[name]
            return param_ref[off:off + r, 0:c]

        h = x
        for li, H in enumerate(hidden_list):
            wi = get(f"wi{li}").astype(jnp.bfloat16)   # [Cprev, H]
            wj = get(f"wj{li}").astype(jnp.bfloat16)   # [Cprev, H]
            we = get(f"we{li}").astype(jnp.bfloat16)   # [Ce, H]
            b = get(f"b{li}")                          # [1, H]  (f32)
            bn = get(f"bn{li}")                        # [2, H]  (scale ; shift)

            h_bf = h.astype(jnp.bfloat16)
            ah = jnp.dot(A, h_bf, preferred_element_type=jnp.float32)     # [N, Cprev]
            dh = deg * h                                                   # f32 VPU
            m = (jnp.dot(dh.astype(jnp.bfloat16), wi,
                         preferred_element_type=jnp.float32)
                 + jnp.dot(ah.astype(jnp.bfloat16), wj,
                           preferred_element_type=jnp.float32)
                 + jnp.dot(eagg_bf, we, preferred_element_type=jnp.float32)
                 + deg * b)                                                # broadcast bias*deg

            h = jnp.maximum(m, 0.0)                    # ReLU inside message passing
            h = h * bn[0:1, :] + bn[1:2, :]            # BatchNorm1d (eval, folded)
            h = jnp.maximum(h, 0.0)                    # ReLU after batch norm
            # dropout: identity in eval mode

        # global_add_pool
        pool = jnp.dot(Bpool, h.astype(jnp.bfloat16),
                       preferred_element_type=jnp.float32)                # [G, H_last]

        # head: fc1 split (no lane-axis concatenates), biases via broadcast add
        graph = get("graph")                            # [G, 1+Cin]  = [size | neighbor]
        w1a = get("fc1_wa").astype(jnp.bfloat16)        # [H_last, M]
        w1b = get("fc1_wb").astype(jnp.bfloat16)        # [1+Cin, M]
        b1 = get("fc1_b")                               # [1, M]
        hh = (jnp.dot(pool.astype(jnp.bfloat16), w1a,
                      preferred_element_type=jnp.float32)
              + jnp.dot(graph.astype(jnp.bfloat16), w1b,
                        preferred_element_type=jnp.float32)
              + b1)
        hh = jnp.maximum(hh, 0.0)
        # dropout: identity in eval mode

        w2 = get("fc2_w").astype(jnp.bfloat16)          # [M, 128] zero-padded lanes
        b2 = get("fc2_b")                               # [1, 128] zero-padded lanes
        out_ref[...] = jnp.dot(hh.astype(jnp.bfloat16), w2,
                               preferred_element_type=jnp.float32) + b2

    return kernel


def model_forward_pallas(node_slab, ab_slab, param_slab, metas, num_graphs):
    N = node_slab.shape[0]
    kernel = make_kernel(metas, HIDDEN_LIST, IN_CHANNELS, EDGE_CHANNELS, N, num_graphs)

    # advisory cost estimate for the XLA scheduler
    flops = 0
    cprev = IN_CHANNELS
    for h in HIDDEN_LIST:
        flops += 2 * N * N * cprev                       # A @ h
        flops += 2 * N * cprev * h * 2                   # dh@Wi + ah@Wj
        flops += 2 * N * EDGE_CHANNELS * h               # eagg@We
        cprev = h
    flops += 2 * num_graphs * N * HIDDEN_LIST[-1]        # pooling matmul
    flops += 2 * num_graphs * (HIDDEN_LIST[-1] + 1 + IN_CHANNELS) * MLP_HIDDEN
    flops += 2 * num_graphs * MLP_HIDDEN * LANE          # fc2 (lane-padded)
    bytes_accessed = (4 * node_slab.size + 2 * ab_slab.size
                      + 4 * param_slab.size + 4 * num_graphs * LANE)

    return pl.pallas_call(
        kernel,
        out_shape=jax.ShapeDtypeStruct((num_graphs, LANE), jnp.float32),
        in_specs=[pl.BlockSpec(memory_space=pltpu.MemorySpace.VMEM)] * 3,
        out_specs=pl.BlockSpec(memory_space=pltpu.MemorySpace.VMEM),
        cost_estimate=pl.CostEstimate(flops=flops, transcendentals=0,
                                      bytes_accessed=bytes_accessed),
    )(node_slab, ab_slab, param_slab)


# -------------------------- deterministic parameters --------------------------
def init_params(key):
    keys = iter(jax.random.split(key, 32))
    layers = []
    prev = IN_CHANNELS
    for h in HIDDEN_LIST:
        wi = 0.2 * jax.random.normal(next(keys), (prev, h), jnp.float32)
        wj = 0.2 * jax.random.normal(next(keys), (prev, h), jnp.float32)
        we = 0.2 * jax.random.normal(next(keys), (EDGE_CHANNELS, h), jnp.float32)
        b = 0.1 * jax.random.normal(next(keys), (1, h), jnp.float32)
        gamma = 1.0 + 0.1 * jax.random.normal(next(keys), (1, h), jnp.float32)
        beta = 0.1 * jax.random.normal(next(keys), (1, h), jnp.float32)
        run_mean = jnp.zeros((1, h), jnp.float32)   # fresh BN running stats (eval fold)
        run_var = jnp.ones((1, h), jnp.float32)
        scale = gamma / jnp.sqrt(run_var + BN_EPS)
        shift = beta - run_mean * scale
        layers.append((wi, wj, we, b, scale, shift))
        prev = h

    din = HIDDEN_LIST[-1] + 1 + IN_CHANNELS
    fc1_w = 0.2 * jax.random.normal(next(keys), (din, MLP_HIDDEN), jnp.float32)
    fc1_b = 0.1 * jax.random.normal(next(keys), (1, MLP_HIDDEN), jnp.float32)
    fc2_w = 0.2 * jax.random.normal(next(keys), (MLP_HIDDEN, NUM_CLASSES), jnp.float32)
    fc2_b = 0.1 * jax.random.normal(next(keys), (1, NUM_CLASSES), jnp.float32)
    return layers, fc1_w, fc1_b, fc2_w, fc2_b


# ------------------------ pure-JAX edge-wise reference ------------------------
def reference_forward(x, edge_index, edge_attr, batch, neighbor,
                      layers, fc1_w, fc1_b, fc2_w, fc2_b, num_graphs):
    N = x.shape[0]
    src = jnp.concatenate([edge_index[0], jnp.arange(N, dtype=jnp.int32)])
    tgt = jnp.concatenate([edge_index[1], jnp.arange(N, dtype=jnp.int32)])
    attr = jnp.concatenate([edge_attr, jnp.ones((N, EDGE_CHANNELS), jnp.float32)], axis=0)

    h = x
    for (wi, wj, we, b, sc, sh) in layers:
        msg = h[tgt] @ wi + h[src] @ wj + attr @ we + b
        agg = jax.ops.segment_sum(msg, tgt, num_segments=N)
        h = jnp.maximum(agg, 0.0)
        h = h * sc + sh
        h = jnp.maximum(h, 0.0)

    pool = jax.ops.segment_sum(h, batch, num_segments=num_graphs)
    sizef = (jnp.bincount(batch, length=num_graphs).astype(jnp.float32) / MAX_SIZE
             ).reshape(num_graphs, 1)
    feat = jnp.concatenate(
        [pool, sizef, neighbor.reshape(num_graphs, IN_CHANNELS)], axis=1)
    o = jnp.maximum(feat @ fc1_w + fc1_b, 0.0)
    return o @ fc2_w + fc2_b


# ------------------------------------ main ------------------------------------
if __name__ == "__main__":
    key = jax.random.PRNGKey(0)
    kx, ke, kn, kp = jax.random.split(key, 4)

    G = 8                  # graphs per batch (multiple of 8 -> dense sublanes)
    PER = 16               # nodes per graph
    N = G * PER            # 128 -> dense lanes for the adjacency matmul

    # node features
    x = 0.5 * jax.random.normal(kx, (N, IN_CHANNELS), jnp.float32)

    # ring edges within each graph (both directions)
    src_l, tgt_l = [], []
    for g in range(G):
        base = g * PER
        for i in range(PER):
            a, b = base + i, base + (i + 1) % PER
            src_l += [a, b]
            tgt_l += [b, a]
    edge_index = jnp.array([src_l, tgt_l], dtype=jnp.int32)   # [2, E]
    E = edge_index.shape[1]
    edge_attr = 0.5 * jax.random.normal(ke, (E, EDGE_CHANNELS), jnp.float32)

    batch = jnp.repeat(jnp.arange(G, dtype=jnp.int32), PER)   # [N]
    neighbor = 0.5 * jax.random.normal(kn, (G * IN_CHANNELS,), jnp.float32)

    # ---------------- plain-JAX glue: dense graph operators ----------------
    src, tgt = edge_index[0], edge_index[1]
    A = jnp.zeros((N, N), jnp.float32).at[tgt, src].add(1.0) + jnp.eye(N, dtype=jnp.float32)
    # TODO(synk): self-loop edge_attr assumed all-ones (PyG add_self_loops fill_value=1).
    eagg = (jnp.zeros((N, EDGE_CHANNELS), jnp.float32).at[tgt].add(edge_attr)
            + jnp.ones((N, EDGE_CHANNELS), jnp.float32))
    deg = jnp.sum(A, axis=1, keepdims=True)
    Bpool = jax.nn.one_hot(batch, G, dtype=jnp.float32).T       # [G, N]
    size_feat = (jnp.bincount(batch, length=G).astype(jnp.float32) / MAX_SIZE
                 ).reshape(G, 1)
    neighbor2 = neighbor.reshape(G, IN_CHANNELS)

    # packed data inputs (3 entry DMAs total)
    node_slab = jnp.concatenate([x, eagg, deg], axis=1)             # [N, Cin+Ce+1] f32
    ab_slab = jnp.concatenate([A, Bpool], axis=0).astype(jnp.bfloat16)  # [N+G, N] bf16 (exact)
    graph_slab = jnp.concatenate([size_feat, neighbor2], axis=1)    # [G, 1+Cin]

    # ---------------- parameters, packed into one VMEM slab ----------------
    layers, fc1_w, fc1_b, fc2_w, fc2_b = init_params(kp)

    named_segments = []
    for li, (wi, wj, we, b, sc, sh) in enumerate(layers):
        named_segments += [(f"wi{li}", wi), (f"wj{li}", wj), (f"we{li}", we),
                           (f"b{li}", b),
                           (f"bn{li}", jnp.concatenate([sc, sh], axis=0))]
    Hlast = HIDDEN_LIST[-1]
    named_segments += [
        ("fc1_wa", fc1_w[:Hlast, :]),                   # rows acting on pooled features
        ("fc1_wb", fc1_w[Hlast:, :]),                   # rows acting on [size | neighbor]
        ("fc1_b", fc1_b),
        ("fc2_w", jnp.pad(fc2_w, ((0, 0), (0, LANE - NUM_CLASSES)))),
        ("fc2_b", jnp.pad(fc2_b, ((0, 0), (0, LANE - NUM_CLASSES)))),
        ("graph", graph_slab),                          # per-graph features ride in the slab
    ]
    param_slab, metas = pack_params(named_segments)

    # ---------------- run kernel + check against edge-wise reference ----------------
    out_pad = model_forward_pallas(node_slab, ab_slab, param_slab, metas, G)
    out_pad = jax.block_until_ready(out_pad)
    out = np.asarray(out_pad)[:, :NUM_CLASSES]

    ref = np.asarray(reference_forward(x, edge_index, edge_attr, batch, neighbor,
                                       layers, fc1_w, fc1_b, fc2_w, fc2_b, G))
    # MXU operands are bf16 (f32 accumulation); tolerance is relative to the
    # output scale to absorb bf16 operand rounding through the network.
    tol = 5e-2 * float(np.max(np.abs(ref)))
    np.testing.assert_allclose(out, ref, rtol=5e-2, atol=tol)

    print("KERNEL_OK")
</pallas_src>

<mosaic_0001>
module attributes {stable_mosaic.version = 11 : i64} {
  func.func @kernel(%arg0: memref<128x13xf32, #tpu.memory_space<vmem>>, %arg1: memref<136x128xbf16, #tpu.memory_space<vmem>>, %arg2: memref<184x128xf32, #tpu.memory_space<vmem>>, %arg3: memref<8x128xf32, #tpu.memory_space<vmem>>) attributes {dimension_semantics = [], scalar_prefetch = 0 : i64, scratch_operands = 0 : i64, tpu.core_type = #tpu.core_type<tc>} {
    %c0 = arith.constant 0 : index
    %c0_0 = arith.constant 0 : index
    %0 = vector.load %arg0[%c0, %c0_0] : memref<128x13xf32, #tpu.memory_space<vmem>>, vector<128x8xf32>
    %c0_1 = arith.constant 0 : index
    %c8 = arith.constant 8 : index
    %1 = vector.load %arg0[%c0_1, %c8] : memref<128x13xf32, #tpu.memory_space<vmem>>, vector<128x4xf32>
    %c0_2 = arith.constant 0 : index
    %c12 = arith.constant 12 : index
    %2 = vector.load %arg0[%c0_2, %c12] : memref<128x13xf32, #tpu.memory_space<vmem>>, vector<128x1xf32>
    %c0_3 = arith.constant 0 : index
    %c0_4 = arith.constant 0 : index
    %3 = vector.load %arg1[%c0_3, %c0_4] : memref<136x128xbf16, #tpu.memory_space<vmem>>, vector<128x128xbf16>
    %c128 = arith.constant 128 : index
    %c0_5 = arith.constant 0 : index
    %4 = vector.load %arg1[%c128, %c0_5] : memref<136x128xbf16, #tpu.memory_space<vmem>>, vector<8x128xbf16>
    %5 = arith.truncf %1 : vector<128x4xf32> to vector<128x4xbf16>
    %c0_6 = arith.constant 0 : index
    %c0_7 = arith.constant 0 : index
    %6 = vector.load %arg2[%c0_6, %c0_7] : memref<184x128xf32, #tpu.memory_space<vmem>>, vector<8x16xf32>
    %7 = arith.truncf %6 : vector<8x16xf32> to vector<8x16xbf16>
    %c8_8 = arith.constant 8 : index
    %c0_9 = arith.constant 0 : index
    %8 = vector.load %arg2[%c8_8, %c0_9] : memref<184x128xf32, #tpu.memory_space<vmem>>, vector<8x16xf32>
    %9 = arith.truncf %8 : vector<8x16xf32> to vector<8x16xbf16>
    %c16 = arith.constant 16 : index
    %c0_10 = arith.constant 0 : index
    %10 = vector.load %arg2[%c16, %c0_10] : memref<184x128xf32, #tpu.memory_space<vmem>>, vector<4x16xf32>
    %11 = arith.truncf %10 : vector<4x16xf32> to vector<4x16xbf16>
    %c24 = arith.constant 24 : index
    %c0_11 = arith.constant 0 : index
    %12 = vector.load %arg2[%c24, %c0_11] : memref<184x128xf32, #tpu.memory_space<vmem>>, vector<1x16xf32>
    %c32 = arith.constant 32 : index
    %c0_12 = arith.constant 0 : index
    %13 = vector.load %arg2[%c32, %c0_12] : memref<184x128xf32, #tpu.memory_space<vmem>>, vector<2x16xf32>
    %14 = arith.truncf %0 : vector<128x8xf32> to vector<128x8xbf16>
    %cst = arith.constant dense<0.000000e+00> : vector<128x8xf32>
    %15 = tpu.matmul %3, %14, %cst {dimension_numbers = #tpu.dot_dimension_numbers<[1], [0], [0], [1], [0, 0, 1, 1], [], []>} : vector<128x128xbf16>, vector<128x8xbf16>, vector<128x8xf32> -> vector<128x8xf32>
    %16 = vector.broadcast %2 : vector<128x1xf32> to vector<128x8xf32>
    %17 = arith.mulf %16, %0 : vector<128x8xf32>
    %18 = arith.truncf %17 : vector<128x8xf32> to vector<128x8xbf16>
    %cst_13 = arith.constant dense<0.000000e+00> : vector<128x16xf32>
    %19 = tpu.matmul %18, %7, %cst_13 {dimension_numbers = #tpu.dot_dimension_numbers<[1], [0], [0], [1], [0, 0, 1, 1], [], []>} : vector<128x8xbf16>, vector<8x16xbf16>, vector<128x16xf32> -> vector<128x16xf32>
    %20 = arith.truncf %15 : vector<128x8xf32> to vector<128x8xbf16>
    %cst_14 = arith.constant dense<0.000000e+00> : vector<128x16xf32>
    %21 = tpu.matmul %20, %9, %cst_14 {dimension_numbers = #tpu.dot_dimension_numbers<[1], [0], [0], [1], [0, 0, 1, 1], [], []>} : vector<128x8xbf16>, vector<8x16xbf16>, vector<128x16xf32> -> vector<128x16xf32>
    %22 = arith.addf %19, %21 : vector<128x16xf32>
    %cst_15 = arith.constant dense<0.000000e+00> : vector<128x16xf32>
    %23 = tpu.matmul %5, %11, %cst_15 {dimension_numbers = #tpu.dot_dimension_numbers<[1], [0], [0], [1], [0, 0, 1, 1], [], []>} : vector<128x4xbf16>, vector<4x16xbf16>, vector<128x16xf32> -> vector<128x16xf32>
    %24 = arith.addf %22, %23 : vector<128x16xf32>
    %25 = vector.broadcast %2 : vector<128x1xf32> to vector<128x16xf32>
    %26 = vector.broadcast %12 : vector<1x16xf32> to vector<128x16xf32>
    %27 = arith.mulf %25, %26 : vector<128x16xf32>
    %28 = arith.addf %24, %27 : vector<128x16xf32>
    %cst_16 = arith.constant 0.000000e+00 : f32
    %29 = vector.broadcast %cst_16 : f32 to vector<128x16xf32>
    %30 = arith.maximumf %28, %29 : vector<128x16xf32>
    %31 = vector.extract_strided_slice %13 {offsets = [0, 0], sizes = [1, 16], strides = [1, 1]} : vector<2x16xf32> to vector<1x16xf32>
    %32 = vector.broadcast %31 : vector<1x16xf32> to vector<128x16xf32>
    %33 = arith.mulf %30, %32 : vector<128x16xf32>
    %34 = vector.extract_strided_slice %13 {offsets = [1, 0], sizes = [1, 16], strides = [1, 1]} : vector<2x16xf32> to vector<1x16xf32>
    %35 = vector.broadcast %34 : vector<1x16xf32> to vector<128x16xf32>
    %36 = arith.addf %33, %35 : vector<128x16xf32>
    %cst_17 = arith.constant 0.000000e+00 : f32
    %37 = vector.broadcast %cst_17 : f32 to vector<128x16xf32>
    %38 = arith.maximumf %36, %37 : vector<128x16xf32>
    %c40 = arith.constant 40 : index
    %c0_18 = arith.constant 0 : index
    %39 = vector.load %arg2[%c40, %c0_18] : memref<184x128xf32, #tpu.memory_space<vmem>>, vector<16x16xf32>
    %40 = arith.truncf %39 : vector<16x16xf32> to vector<16x16xbf16>
    %c56 = arith.constant 56 : index
    %c0_19 = arith.constant 0 : index
    %41 = vector.load %arg2[%c56, %c0_19] : memref<184x128xf32, #tpu.memory_space<vmem>>, vector<16x16xf32>
    %42 = arith.truncf %41 : vector<16x16xf32> to vector<16x16xbf16>
    %c72 = arith.constant 72 : index
    %c0_20 = arith.constant 0 : index
    %43 = vector.load %arg2[%c72, %c0_20] : memref<184x128xf32, #tpu.memory_space<vmem>>, vector<4x16xf32>
    %44 = arith.truncf %43 : vector<4x16xf32> to vector<4x16xbf16>
    %c80 = arith.constant 80 : index
    %c0_21 = arith.constant 0 : index
    %45 = vector.load %arg2[%c80, %c0_21] : memref<184x128xf32, #tpu.memory_space<vmem>>, vector<1x16xf32>
    %c88 = arith.constant 88 : index
    %c0_22 = arith.constant 0 : index
    %46 = vector.load %arg2[%c88, %c0_22] : memref<184x128xf32, #tpu.memory_space<vmem>>, vector<2x16xf32>
    %47 = arith.truncf %38 : vector<128x16xf32> to vector<128x16xbf16>
    %cst_23 = arith.constant dense<0.000000e+00> : vector<128x16xf32>
    %48 = tpu.matmul %3, %47, %cst_23 {dimension_numbers = #tpu.dot_dimension_numbers<[1], [0], [0], [1], [0, 0, 1, 1], [], []>} : vector<128x128xbf16>, vector<128x16xbf16>, vector<128x16xf32> -> vector<128x16xf32>
    %49 = vector.broadcast %2 : vector<128x1xf32> to vector<128x16xf32>
    %50 = arith.mulf %49, %38 : vector<128x16xf32>
    %51 = arith.truncf %50 : vector<128x16xf32> to vector<128x16xbf16>
    %cst_24 = arith.constant dense<0.000000e+00> : vector<128x16xf32>
    %52 = tpu.matmul %51, %40, %cst_24 {dimension_numbers = #tpu.dot_dimension_numbers<[1], [0], [0], [1], [0, 0, 1, 1], [], []>} : vector<128x16xbf16>, vector<16x16xbf16>, vector<128x16xf32> -> vector<128x16xf32>
    %53 = arith.truncf %48 : vector<128x16xf32> to vector<128x16xbf16>
    %cst_25 = arith.constant dense<0.000000e+00> : vector<128x16xf32>
    %54 = tpu.matmul %53, %42, %cst_25 {dimension_numbers = #tpu.dot_dimension_numbers<[1], [0], [0], [1], [0, 0, 1, 1], [], []>} : vector<128x16xbf16>, vector<16x16xbf16>, vector<128x16xf32> -> vector<128x16xf32>
    %55 = arith.addf %52, %54 : vector<128x16xf32>
    %cst_26 = arith.constant dense<0.000000e+00> : vector<128x16xf32>
    %56 = tpu.matmul %5, %44, %cst_26 {dimension_numbers = #tpu.dot_dimension_numbers<[1], [0], [0], [1], [0, 0, 1, 1], [], []>} : vector<128x4xbf16>, vector<4x16xbf16>, vector<128x16xf32> -> vector<128x16xf32>
    %57 = arith.addf %55, %56 : vector<128x16xf32>
    %58 = vector.broadcast %2 : vector<128x1xf32> to vector<128x16xf32>
    %59 = vector.broadcast %45 : vector<1x16xf32> to vector<128x16xf32>
    %60 = arith.mulf %58, %59 : vector<128x16xf32>
    %61 = arith.addf %57, %60 : vector<128x16xf32>
    %cst_27 = arith.constant 0.000000e+00 : f32
    %62 = vector.broadcast %cst_27 : f32 to vector<128x16xf32>
    %63 = arith.maximumf %61, %62 : vector<128x16xf32>
    %64 = vector.extract_strided_slice %46 {offsets = [0, 0], sizes = [1, 16], strides = [1, 1]} : vector<2x16xf32> to vector<1x16xf32>
    %65 = vector.broadcast %64 : vector<1x16xf32> to vector<128x16xf32>
    %66 = arith.mulf %63, %65 : vector<128x16xf32>
    %67 = vector.extract_strided_slice %46 {offsets = [1, 0], sizes = [1, 16], strides = [1, 1]} : vector<2x16xf32> to vector<1x16xf32>
    %68 = vector.broadcast %67 : vector<1x16xf32> to vector<128x16xf32>
    %69 = arith.addf %66, %68 : vector<128x16xf32>
    %cst_28 = arith.constant 0.000000e+00 : f32
    %70 = vector.broadcast %cst_28 : f32 to vector<128x16xf32>
    %71 = arith.maximumf %69, %70 : vector<128x16xf32>
    %72 = arith.truncf %71 : vector<128x16xf32> to vector<128x16xbf16>
    %cst_29 = arith.constant dense<0.000000e+00> : vector<8x16xf32>
    %73 = tpu.matmul %4, %72, %cst_29 {dimension_numbers = #tpu.dot_dimension_numbers<[1], [0], [0], [1], [0, 0, 1, 1], [], []>} : vector<8x128xbf16>, vector<128x16xbf16>, vector<8x16xf32> -> vector<8x16xf32>
    %c176 = arith.constant 176 : index
    %c0_30 = arith.constant 0 : index
    %74 = vector.load %arg2[%c176, %c0_30] : memref<184x128xf32, #tpu.memory_space<vmem>>, vector<8x9xf32>
    %c96 = arith.constant 96 : index
    %c0_31 = arith.constant 0 : index
    %75 = vector.load %arg2[%c96, %c0_31] : memref<184x128xf32, #tpu.memory_space<vmem>>, vector<16x32xf32>
    %76 = arith.truncf %75 : vector<16x32xf32> to vector<16x32xbf16>
    %c112 = arith.constant 112 : index
    %c0_32 = arith.constant 0 : index
    %77 = vector.load %arg2[%c112, %c0_32] : memref<184x128xf32, #tpu.memory_space<vmem>>, vector<9x32xf32>
    %78 = arith.truncf %77 : vector<9x32xf32> to vector<9x32xbf16>
    %c128_33 = arith.constant 128 : index
    %c0_34 = arith.constant 0 : index
    %79 = vector.load %arg2[%c128_33, %c0_34] : memref<184x128xf32, #tpu.memory_space<vmem>>, vector<1x32xf32>
    %80 = arith.truncf %73 : vector<8x16xf32> to vector<8x16xbf16>
    %cst_35 = arith.constant dense<0.000000e+00> : vector<8x32xf32>
    %81 = tpu.matmul %80, %76, %cst_35 {dimension_numbers = #tpu.dot_dimension_numbers<[1], [0], [0], [1], [0, 0, 1, 1], [], []>} : vector<8x16xbf16>, vector<16x32xbf16>, vector<8x32xf32> -> vector<8x32xf32>
    %82 = arith.truncf %74 : vector<8x9xf32> to vector<8x9xbf16>
    %cst_36 = arith.constant dense<0.000000e+00> : vector<8x32xf32>
    %83 = tpu.matmul %82, %78, %cst_36 {dimension_numbers = #tpu.dot_dimension_numbers<[1], [0], [0], [1], [0, 0, 1, 1], [], []>} : vector<8x9xbf16>, vector<9x32xbf16>, vector<8x32xf32> -> vector<8x32xf32>
    %84 = arith.addf %81, %83 : vector<8x32xf32>
    %85 = vector.broadcast %79 : vector<1x32xf32> to vector<8x32xf32>
    %86 = arith.addf %84, %85 : vector<8x32xf32>
    %cst_37 = arith.constant 0.000000e+00 : f32
    %87 = vector.broadcast %cst_37 : f32 to vector<8x32xf32>
    %88 = arith.maximumf %86, %87 : vector<8x32xf32>
    %c136 = arith.constant 136 : index
    %c0_38 = arith.constant 0 : index
    %89 = vector.load %arg2[%c136, %c0_38] : memref<184x128xf32, #tpu.memory_space<vmem>>, vector<32x128xf32>
    %90 = arith.truncf %89 : vector<32x128xf32> to vector<32x128xbf16>
    %c168 = arith.constant 168 : index
    %c0_39 = arith.constant 0 : index
    %91 = vector.load %arg2[%c168, %c0_39] : memref<184x128xf32, #tpu.memory_space<vmem>>, vector<1x128xf32>
    %92 = arith.truncf %88 : vector<8x32xf32> to vector<8x32xbf16>
    %cst_40 = arith.constant dense<0.000000e+00> : vector<8x128xf32>
    %93 = tpu.matmul %92, %90, %cst_40 {dimension_numbers = #tpu.dot_dimension_numbers<[1], [0], [0], [1], [0, 0, 1, 1], [], []>} : vector<8x32xbf16>, vector<32x128xbf16>, vector<8x128xf32> -> vector<8x128xf32>
    %94 = vector.broadcast %91 : vector<1x128xf32> to vector<8x128xf32>
    %95 = arith.addf %93, %94 : vector<8x128xf32>
    %c0_41 = arith.constant 0 : index
    %c0_42 = arith.constant 0 : index
    %96 = vector.load %arg3[%c0_41, %c0_42] : memref<8x128xf32, #tpu.memory_space<vmem>>, vector<8x128xf32>
    tpu.vector_store %arg3[%c0_41, %c0_42], %95 {strides = array<i32>} : memref<8x128xf32, #tpu.memory_space<vmem>>, vector<8x128xf32>,
    return
  }
}

</mosaic_0001>

<llo_original>
// kernel: tpu_custom_call.1
$region0: #{tpu_custom_call.1}
  #allocation0 [shape = 'u32[]', space=smem, size = 0x4, offset = 0x4, fixed_abs, tag = 'smem constant byte address 0x4 - core index']
  #allocation1 [shape = 'u32[72,128]{1,0:T(1,128)}', space=vmem, size = 0x9000, scoped, tag = 'internal scratch']
  %s0 = inlined_call_operand.vmem [shape: f32[128,13], index: 0, kind: input, shape index: {}]
  %s1 = inlined_call_operand.vmem [shape: bf16[136,128], index: 1, kind: input, shape index: {}]
  %s2 = inlined_call_operand.hbm [shape: f32[184,128], index: 2, kind: input, shape index: {}]
  %s3 = inlined_call_operand.hbm [shape: f32[8,128], index: 3, kind: output, shape index: {}]
  %s4 = sld [smem:[#allocation0]]
  $region26: #{tpu_custom_call.1} parent=0
    _
  %s6 = ssub.s32 1, %s4
  %s7 = scalar_select 0, %s6, %s4
  $region1: #{tpu_custom_call.1} parent=0
    #allocation2 [shape = 'u8[94208]{0}', space=vmem, size = 0x17000, scoped, tag = 'input window, operand 2, single buffered']
    #allocation3 [shape = 's32[1]{0}', space=sflag, size = 0x4, scoped, tag = 'scoped memory for tpu_custom_call.1']
    #allocation4 [shape = 's32[1]{0}', space=sflag, size = 0x4, scoped, tag = 'scoped memory for tpu_custom_call.1']
    #allocation5 [shape = 'u8[4096]{0}', space=vmem, size = 0x1000, scoped, tag = 'output window, operand 0, single buffered']
    %8 = vsyncpa [#allocation3], 0
    %9 = vsyncpa [#allocation4], 0
    // Predicated region
    $region2: #{tpu_custom_call.1} parent=1 // pred_check
      _
    $region3: #{tpu_custom_call.1} parent=1 // pred_check_branch
      %11 = sbr.rel (0) target = $region5
    $region4: #{tpu_custom_call.1} parent=1 // pred_region
      _
    $region5: #{tpu_custom_call.1} parent=1 // pred_fallthru
      _
    // Predicated region
    $region6: #{tpu_custom_call.1} parent=1 // pred_check
      _
    $region7: #{tpu_custom_call.1} parent=1 // pred_check_branch
      %13 = sbr.rel (0) target = $region9
    $region8: #{tpu_custom_call.1} parent=1 // pred_region
      _
    $region9: #{tpu_custom_call.1} parent=1 // pred_fallthru
      _
    // Predicated region
    $region10: #{tpu_custom_call.1} parent=1 // pred_check
      _
    $region11: #{tpu_custom_call.1} parent=1 // pred_check_branch
      %15 = sbr.rel (0) target = $region13
    $region12: #{tpu_custom_call.1} parent=1 // pred_region
      %17 = vsyncadd [#allocation3], 0
      %s18 = sshll.u32 %s2, 4
      %s19 = int_to_ptr.hbm [resolvable:$true] %s18
      %s20 = sshll.u32 [#allocation2], 4
      %s21 = int_to_ptr.vmem [resolvable:$true] %s20
      %26 = dma.hbm_to_vmem [thread:$0]  %s19, 2944, %s21, [#allocation3], 128, 128, 8
    $region13: #{tpu_custom_call.1} parent=1 // pred_fallthru
      _
    // Predicated region
    $region14: #{tpu_custom_call.1} parent=1 // pred_check
      _
    $region15: #{tpu_custom_call.1} parent=1 // pred_check_branch
      %28 = sbr.rel (0) target = $region17
    $region16: #{tpu_custom_call.1} parent=1 // pred_region
      %30 = dma.done [#allocation3], 2944
    $region17: #{tpu_custom_call.1} parent=1 // pred_fallthru
      _
    %v32 = vld [vmem:[%s0] sm:$0xff]
    %v33 = vld [vmem:[%s0 + $0x8] sm:$0xff]
    %v34 = vld [vmem:[%s0 + $0x10] sm:$0xff]
    %v35 = vld [vmem:[%s0 + $0x18] sm:$0xff]
    %v36 = vld [vmem:[%s0 + $0x20] sm:$0xff]
    %v37 = vld [vmem:[%s0 + $0x28] sm:$0xff]
    %v38 = vld [vmem:[%s0 + $0x30] sm:$0xff]
    %v39 = vld [vmem:[%s0 + $0x38] sm:$0xff]
    %v40 = vld [vmem:[%s0 + $0x40] sm:$0xff]
    %v41 = vld [vmem:[%s0 + $0x48] sm:$0xff]
    %v42 = vld [vmem:[%s0 + $0x50] sm:$0xff]
    %v43 = vld [vmem:[%s0 + $0x58] sm:$0xff]
    %v44 = vld [vmem:[%s0 + $0x60] sm:$0xff]
    %v45 = vld [vmem:[%s0 + $0x68] sm:$0xff]
    %v46 = vld [vmem:[%s0 + $0x70] sm:$0xff]
    %v47 = vld [vmem:[%s0 + $0x78] sm:$0xff]
    %v48 = vld [vmem:[%s1] sm:$0xf]
    %v49 = vld [vmem:[%s1 + $0x4] sm:$0xf]
    %v50 = vld [vmem:[%s1 + $0x8] sm:$0xf]
    %v51 = vld [vmem:[%s1 + $0xc] sm:$0xf]
    %v52 = vld [vmem:[%s1 + $0x10] sm:$0xf]
    %v53 = vld [vmem:[%s1 + $0x14] sm:$0xf]
    %v54 = vld [vmem:[%s1 + $0x18] sm:$0xf]
    %v55 = vld [vmem:[%s1 + $0x1c] sm:$0xf]
    %v56 = vld [vmem:[%s1 + $0x20] sm:$0xf]
    %v57 = vld [vmem:[%s1 + $0x24] sm:$0xf]
    %v58 = vld [vmem:[%s1 + $0x28] sm:$0xf]
    %v59 = vld [vmem:[%s1 + $0x2c] sm:$0xf]
    %v60 = vld [vmem:[%s1 + $0x30] sm:$0xf]
    %v61 = vld [vmem:[%s1 + $0x34] sm:$0xf]
    %v62 = vld [vmem:[%s1 + $0x38] sm:$0xf]
    %v63 = vld [vmem:[%s1 + $0x3c] sm:$0xf]
    %v64 = vld [vmem:[%s1 + $0x40] sm:$0xf]
    %v65 = vpack.c.bf16 %v33, %v32
    %v66 = vpack.c.bf16 %v35, %v34
    %v67 = vpack.c.bf16 %v37, %v36
    %v68 = vpack.c.bf16 %v39, %v38
    %v69 = vpack.c.bf16 %v41, %v40
    %v70 = vpack.c.bf16 %v43, %v42
    %v71 = vpack.c.bf16 %v45, %v44
    %v72 = vpack.c.bf16 %v47, %v46
    %v73 = vld [vmem:[#allocation2] sm:$0xff]
    %v74 = vpack.c.bf16 %v73, %v73
    %v75 = vld [vmem:[#allocation2 + $0x8] sm:$0xff]
    %v76 = vpack.c.bf16 %v75, %v75
    %v77 = vld [vmem:[#allocation2 + $0x10] sm:$0xf]
    %v78 = vpack.c.bf16 %v77, %v77
    %v79 = vld [vmem:[#allocation2 + $0x18] sm:$0x1]
    %v80 = vld [vmem:[#allocation2 + $0x20] sm:$0x3]
    %v97 = vunpack.c.l.b16 %v48
    %v98 = vunpack.c.l.b16 %v49
    %v99 = vunpack.c.l.b16 %v50
    %v100 = vunpack.c.l.b16 %v51
    %v101 = vunpack.c.l.b16 %v52
    %v102 = vunpack.c.l.b16 %v53
    %v103 = vunpack.c.l.b16 %v54
    %v104 = vunpack.c.l.b16 %v55
    %v105 = vunpack.c.l.b16 %v56
    %v106 = vunpack.c.l.b16 %v57
    %v107 = vunpack.c.l.b16 %v58
    %v108 = vunpack.c.l.b16 %v59
    %v109 = vunpack.c.l.b16 %v60
    %v110 = vunpack.c.l.b16 %v61
    %v111 = vunpack.c.l.b16 %v62
    %v112 = vunpack.c.l.b16 %v63
    %v113 = vpack.c.b16 %v98, %v97
    %v114 = vpack.c.b16 %v100, %v99
    %v115 = vpack.c.b16 %v102, %v101
    %v116 = vpack.c.b16 %v104, %v103
    %v117 = vpack.c.b16 %v106, %v105
    %v118 = vpack.c.b16 %v108, %v107
    %v119 = vpack.c.b16 %v110, %v109
    %v120 = vpack.c.b16 %v112, %v111
    %129 = vmatpush.bf16.msra.mxu0 %v72
    %130 = vmatpush.bf16.msra.mxu0 %v71
    %131 = vmatpush.bf16.msra.mxu0 %v70
    %132 = vmatpush.bf16.msra.mxu0 %v69
    %133 = vmatpush.bf16.msra.mxu0 %v68
    %134 = vmatpush.bf16.msra.mxu0 %v67
    %135 = vmatpush.bf16.msra.mxu0 %v66
    %136 = vmatpush.bf16.msra.mxu0 %v65
    %137 = vmatmul.bf16.gmra.mxu0 %v113
    %v138 = vpop.f32.mrf.mxu0
    %v139 = vadd.f32 0.0, %v138
    %v140 = vpop.f32.mrf.mxu0
    %v141 = vadd.f32 0.0, %v140
    %142 = vmatmul.bf16.gmra.mxu0 %v114
    %v143 = vpop.f32.mrf.mxu0
    %v144 = vadd.f32 0.0, %v143
    %v145 = vpop.f32.mrf.mxu0
    %v146 = vadd.f32 0.0, %v145
    %147 = vmatmul.bf16.gmra.mxu0 %v115
    %v148 = vpop.f32.mrf.mxu0
    %v149 = vadd.f32 0.0, %v148
    %v150 = vpop.f32.mrf.mxu0
    %v151 = vadd.f32 0.0, %v150
    %152 = vmatmul.bf16.gmra.mxu0 %v116
    %v153 = vpop.f32.mrf.mxu0
    %v154 = vadd.f32 0.0, %v153
    %v155 = vpop.f32.mrf.mxu0
    %v156 = vadd.f32 0.0, %v155
    %157 = vmatmul.bf16.gmra.mxu0 %v117
    %v158 = vpop.f32.mrf.mxu0
    %v159 = vadd.f32 0.0, %v158
    %v160 = vpop.f32.mrf.mxu0
    %v161 = vadd.f32 0.0, %v160
    %162 = vmatmul.bf16.gmra.mxu0 %v118
    %v163 = vpop.f32.mrf.mxu0
    %v164 = vadd.f32 0.0, %v163
    %v165 = vpop.f32.mrf.mxu0
    %v166 = vadd.f32 0.0, %v165
    %167 = vmatmul.bf16.gmra.mxu0 %v119
    %v168 = vpop.f32.mrf.mxu0
    %v169 = vadd.f32 0.0, %v168
    %v170 = vpop.f32.mrf.mxu0
    %v171 = vadd.f32 0.0, %v170
    %172 = vmatmul.bf16.gmra.mxu0 %v120
    %v173 = vpop.f32.mrf.mxu0
    %v174 = vadd.f32 0.0, %v173
    %v175 = vpop.f32.mrf.mxu0
    %v176 = vadd.f32 0.0, %v175
    %177 = vdwg.mxu0
    %179 = vset.pattern.permute.xlu0 12
    %180 = vperm.xlu0 %179, %v32
    %v181 = vpop.permute.xlu0 %180
    %184 = vset.pattern.permute.xlu0 12
    %185 = vperm.xlu0 %184, %v33
    %v186 = vpop.permute.xlu0 %185
    %189 = vset.pattern.permute.xlu0 12
    %190 = vperm.xlu0 %189, %v34
    %v191 = vpop.permute.xlu0 %190
    %194 = vset.pattern.permute.xlu0 12
    %195 = vperm.xlu0 %194, %v35
    %v196 = vpop.permute.xlu0 %195
    %199 = vset.pattern.permute.xlu0 12
    %200 = vperm.xlu0 %199, %v36
    %v201 = vpop.permute.xlu0 %200
    %204 = vset.pattern.permute.xlu0 12
    %205 = vperm.xlu0 %204, %v37
    %v206 = vpop.permute.xlu0 %205
    %209 = vset.pattern.permute.xlu0 12
    %210 = vperm.xlu0 %209, %v38
    %v211 = vpop.permute.xlu0 %210
    %214 = vset.pattern.permute.xlu0 12
    %215 = vperm.xlu0 %214, %v39
    %v216 = vpop.permute.xlu0 %215
    %219 = vset.pattern.permute.xlu0 12
    %220 = vperm.xlu0 %219, %v40
    %v221 = vpop.permute.xlu0 %220
    %224 = vset.pattern.permute.xlu0 12
    %225 = vperm.xlu0 %224, %v41
    %v226 = vpop.permute.xlu0 %225
    %229 = vset.pattern.permute.xlu0 12
    %230 = vperm.xlu0 %229, %v42
    %v231 = vpop.permute.xlu0 %230
    %234 = vset.pattern.permute.xlu0 12
    %235 = vperm.xlu0 %234, %v43
    %v236 = vpop.permute.xlu0 %235
    %239 = vset.pattern.permute.xlu0 12
    %240 = vperm.xlu0 %239, %v44
    %v241 = vpop.permute.xlu0 %240
    %244 = vset.pattern.permute.xlu0 12
    %245 = vperm.xlu0 %244, %v45
    %v246 = vpop.permute.xlu0 %245
    %249 = vset.pattern.permute.xlu0 12
    %250 = vperm.xlu0 %249, %v46
    %v251 = vpop.permute.xlu0 %250
    %254 = vset.pattern.permute.xlu0 12
    %255 = vperm.xlu0 %254, %v47
    %v256 = vpop.permute.xlu0 %255
    %v258 = vmul.f32 %v181, %v32
    %v259 = vmul.f32 %v186, %v33
    %v260 = vmul.f32 %v191, %v34
    %v261 = vmul.f32 %v196, %v35
    %v262 = vmul.f32 %v201, %v36
    %v263 = vmul.f32 %v206, %v37
    %v264 = vmul.f32 %v211, %v38
    %v265 = vmul.f32 %v216, %v39
    %v266 = vmul.f32 %v221, %v40
    %v267 = vmul.f32 %v226, %v41
    %v268 = vmul.f32 %v231, %v42
    %v269 = vmul.f32 %v236, %v43
    %v270 = vmul.f32 %v241, %v44
    %v271 = vmul.f32 %v246, %v45
    %v272 = vmul.f32 %v251, %v46
    %v273 = vmul.f32 %v256, %v47
    %v274 = vpack.c.bf16 %v259, %v258
    %v275 = vpack.c.bf16 %v261, %v260
    %v276 = vpack.c.bf16 %v263, %v262
    %v277 = vpack.c.bf16 %v265, %v264
    %v278 = vpack.c.bf16 %v267, %v266
    %v279 = vpack.c.bf16 %v269, %v268
    %v280 = vpack.c.bf16 %v271, %v270
    %v281 = vpack.c.bf16 %v273, %v272
    %v282 = vpack.c.bf16 %v141, %v139
    %v283 = vpack.c.bf16 %v146, %v144
    %v284 = vpack.c.bf16 %v151, %v149
    %v285 = vpack.c.bf16 %v156, %v154
    %v286 = vpack.c.bf16 %v161, %v159
    %v287 = vpack.c.bf16 %v166, %v164
    %v288 = vpack.c.bf16 %v171, %v169
    %v289 = vpack.c.bf16 %v176, %v174
    %vm290 = vcmask 64512
    %v292 = vsel %vm290, %v282, 0
    %v295 = vsel %vm290, %v283, 0
    %v298 = vsel %vm290, %v284, 0
    %v301 = vsel %vm290, %v285, 0
    %v304 = vsel %vm290, %v286, 0
    %v307 = vsel %vm290, %v287, 0
    %v310 = vsel %vm290, %v288, 0
    %v313 = vsel %vm290, %v289, 0
    %vm315 = vcmask 1043456
    %v317 = vsel %vm315, %v76, 0
    %319 = vmatpush.bf16.msra.mxu0 0
    %320 = vmatpush.bf16.msra.mxu0 0
    %321 = vmatpush.bf16.msra.mxu0 0
    %322 = vmatpush.bf16.msra.mxu0 0
    %323 = vmatpush.bf16.msra.mxu0 0
    %324 = vmatpush.bf16.msra.mxu0 0
    %325 = vmatpush.bf16.msra.mxu0 0
    %326 = vmatpush.bf16.msra.mxu0 %v317
    %327 = vmatmul.bf16.gmra.mxu0 %v292
    %v328 = vpop.f32.mrf.mxu0
    %v329 = vadd.f32 0.0, %v328
    %v330 = vpop.f32.mrf.mxu0
    %v331 = vadd.f32 0.0, %v330
    %332 = vmatmul.bf16.gmra.mxu0 %v295
    %v333 = vpop.f32.mrf.mxu0
    %v334 = vadd.f32 0.0, %v333
    %v335 = vpop.f32.mrf.mxu0
    %v336 = vadd.f32 0.0, %v335
    %337 = vmatmul.bf16.gmra.mxu0 %v298
    %v338 = vpop.f32.mrf.mxu0
    %v339 = vadd.f32 0.0, %v338
    %v340 = vpop.f32.mrf.mxu0
    %v341 = vadd.f32 0.0, %v340
    %342 = vmatmul.bf16.gmra.mxu0 %v301
    %v343 = vpop.f32.mrf.mxu0
    %v344 = vadd.f32 0.0, %v343
    %v345 = vpop.f32.mrf.mxu0
    %v346 = vadd.f32 0.0, %v345
    %347 = vmatmul.bf16.gmra.mxu0 %v304
    %v348 = vpop.f32.mrf.mxu0
    %v349 = vadd.f32 0.0, %v348
    %v350 = vpop.f32.mrf.mxu0
    %v351 = vadd.f32 0.0, %v350
    %352 = vmatmul.bf16.gmra.mxu0 %v307
    %v353 = vpop.f32.mrf.mxu0
    %v354 = vadd.f32 0.0, %v353
    %v355 = vpop.f32.mrf.mxu0
    %v356 = vadd.f32 0.0, %v355
    %357 = vmatmul.bf16.gmra.mxu0 %v310
    %v358 = vpop.f32.mrf.mxu0
    %v359 = vadd.f32 0.0, %v358
    %v360 = vpop.f32.mrf.mxu0
    %v361 = vadd.f32 0.0, %v360
    %362 = vmatmul.bf16.gmra.mxu0 %v313
    %v363 = vpop.f32.mrf.mxu0
    %v364 = vadd.f32 0.0, %v363
    %v365 = vpop.f32.mrf.mxu0
    %v366 = vadd.f32 0.0, %v365
    %367 = vdwg.mxu0
    %v369 = vsel %vm290, %v274, 0
    %v372 = vsel %vm290, %v275, 0
    %v375 = vsel %vm290, %v276, 0
    %v378 = vsel %vm290, %v277, 0
    %v381 = vsel %vm290, %v278, 0
    %v384 = vsel %vm290, %v279, 0
    %v387 = vsel %vm290, %v280, 0
    %v390 = vsel %vm290, %v281, 0
    %v393 = vsel %vm315, %v74, 0
    %395 = vmatpush.bf16.msra.mxu0 0
    %396 = vmatpush.bf16.msra.mxu0 0
    %397 = vmatpush.bf16.msra.mxu0 0
    %398 = vmatpush.bf16.msra.mxu0 0
    %399 = vmatpush.bf16.msra.mxu0 0
    %400 = vmatpush.bf16.msra.mxu0 0
    %401 = vmatpush.bf16.msra.mxu0 0
    %402 = vmatpush.bf16.msra.mxu0 %v393
    %403 = vmatmul.bf16.gmra.mxu0 %v369
    %v404 = vpop.f32.mrf.mxu0
    %v405 = vadd.f32 %v329, %v404
    %v406 = vpop.f32.mrf.mxu0
    %v407 = vadd.f32 %v331, %v406
    %408 = vmatmul.bf16.gmra.mxu0 %v372
    %v409 = vpop.f32.mrf.mxu0
    %v410 = vadd.f32 %v334, %v409
    %v411 = vpop.f32.mrf.mxu0
    %v412 = vadd.f32 %v336, %v411
    %413 = vmatmul.bf16.gmra.mxu0 %v375
    %v414 = vpop.f32.mrf.mxu0
    %v415 = vadd.f32 %v339, %v414
    %v416 = vpop.f32.mrf.mxu0
    %v417 = vadd.f32 %v341, %v416
    %418 = vmatmul.bf16.gmra.mxu0 %v378
    %v419 = vpop.f32.mrf.mxu0
    %v420 = vadd.f32 %v344, %v419
    %v421 = vpop.f32.mrf.mxu0
    %v422 = vadd.f32 %v346, %v421
    %423 = vmatmul.bf16.gmra.mxu0 %v381
    %v424 = vpop.f32.mrf.mxu0
    %v425 = vadd.f32 %v349, %v424
    %v426 = vpop.f32.mrf.mxu0
    %v427 = vadd.f32 %v351, %v426
    %428 = vmatmul.bf16.gmra.mxu0 %v384
    %v429 = vpop.f32.mrf.mxu0
    %v430 = vadd.f32 %v354, %v429
    %v431 = vpop.f32.mrf.mxu0
    %v432 = vadd.f32 %v356, %v431
    %433 = vmatmul.bf16.gmra.mxu0 %v387
    %v434 = vpop.f32.mrf.mxu0
    %v435 = vadd.f32 %v359, %v434
    %v436 = vpop.f32.mrf.mxu0
    %v437 = vadd.f32 %v361, %v436
    %438 = vmatmul.bf16.gmra.mxu0 %v390
    %v439 = vpop.f32.mrf.mxu0
    %v440 = vadd.f32 %v364, %v439
    %v441 = vpop.f32.mrf.mxu0
    %v442 = vadd.f32 %v366, %v441
    %443 = vdwg.mxu0
    %452 = vrot.lane.b32.xlu0 %v65, 120
    %v453 = vpop.permute.xlu0 %452
    %454 = vrot.lane.b32.xlu0 %v66, 120
    %v455 = vpop.permute.xlu0 %454
    %456 = vrot.lane.b32.xlu0 %v67, 120
    %v457 = vpop.permute.xlu0 %456
    %458 = vrot.lane.b32.xlu0 %v68, 120
    %v459 = vpop.permute.xlu0 %458
    %460 = vrot.lane.b32.xlu0 %v69, 120
    %v461 = vpop.permute.xlu0 %460
    %462 = vrot.lane.b32.xlu0 %v70, 120
    %v463 = vpop.permute.xlu0 %462
    %464 = vrot.lane.b32.xlu0 %v71, 120
    %v465 = vpop.permute.xlu0 %464
    %466 = vrot.lane.b32.xlu0 %v72, 120
    %v467 = vpop.permute.xlu0 %466
    %vm468 = vcmask 31744
    %v470 = vsel %vm468, %v453, 0
    %v473 = vsel %vm468, %v455, 0
    %v476 = vsel %vm468, %v457, 0
    %v479 = vsel %vm468, %v459, 0
    %v482 = vsel %vm468, %v461, 0
    %v485 = vsel %vm468, %v463, 0
    %v488 = vsel %vm468, %v465, 0
    %v491 = vsel %vm468, %v467, 0
    %vm493 = vcmask 1041408
    %v495 = vsel %vm493, %v78, 0
    %497 = vmatpush.bf16.msra.mxu0 0
    %498 = vmatpush.bf16.msra.mxu0 0
    %499 = vmatpush.bf16.msra.mxu0 0
    %500 = vmatpush.bf16.msra.mxu0 0
    %501 = vmatpush.bf16.msra.mxu0 0
    %502 = vmatpush.bf16.msra.mxu0 0
    %503 = vmatpush.bf16.msra.mxu0 0
    %504 = vmatpush.bf16.msra.mxu0 %v495
    %505 = vmatmul.bf16.gmra.mxu0 %v470
    %v506 = vpop.f32.mrf.mxu0
    %v507 = vadd.f32 0.0, %v506
    %v508 = vpop.f32.mrf.mxu0
    %v509 = vadd.f32 0.0, %v508
    %510 = vmatmul.bf16.gmra.mxu0 %v473
    %v511 = vpop.f32.mrf.mxu0
    %v512 = vadd.f32 0.0, %v511
    %v513 = vpop.f32.mrf.mxu0
    %v514 = vadd.f32 0.0, %v513
    %515 = vmatmul.bf16.gmra.mxu0 %v476
    %v516 = vpop.f32.mrf.mxu0
    %v517 = vadd.f32 0.0, %v516
    %v518 = vpop.f32.mrf.mxu0
    %v519 = vadd.f32 0.0, %v518
    %520 = vmatmul.bf16.gmra.mxu0 %v479
    %v521 = vpop.f32.mrf.mxu0
    %v522 = vadd.f32 0.0, %v521
    %v523 = vpop.f32.mrf.mxu0
    %v524 = vadd.f32 0.0, %v523
    %525 = vmatmul.bf16.gmra.mxu0 %v482
    %v526 = vpop.f32.mrf.mxu0
    %v527 = vadd.f32 0.0, %v526
    %v528 = vpop.f32.mrf.mxu0
    %v529 = vadd.f32 0.0, %v528
    %530 = vmatmul.bf16.gmra.mxu0 %v485
    %v531 = vpop.f32.mrf.mxu0
    %v532 = vadd.f32 0.0, %v531
    %v533 = vpop.f32.mrf.mxu0
    %v534 = vadd.f32 0.0, %v533
    %535 = vmatmul.bf16.gmra.mxu0 %v488
    %v536 = vpop.f32.mrf.mxu0
    %v537 = vadd.f32 0.0, %v536
    %v538 = vpop.f32.mrf.mxu0
    %v539 = vadd.f32 0.0, %v538
    %540 = vmatmul.bf16.gmra.mxu0 %v491
    %v541 = vpop.f32.mrf.mxu0
    %v542 = vadd.f32 0.0, %v541
    %v543 = vpop.f32.mrf.mxu0
    %v544 = vadd.f32 0.0, %v543
    %545 = vdwg.mxu0
    %v546 = vadd.f32 %v405, %v507
    %v547 = vadd.f32 %v407, %v509
    %v548 = vadd.f32 %v410, %v512
    %v549 = vadd.f32 %v412, %v514
    %v550 = vadd.f32 %v415, %v517
    %v551 = vadd.f32 %v417, %v519
    %v552 = vadd.f32 %v420, %v522
    %v553 = vadd.f32 %v422, %v524
    %v554 = vadd.f32 %v425, %v527
    %v555 = vadd.f32 %v427, %v529
    %v556 = vadd.f32 %v430, %v532
    %v557 = vadd.f32 %v432, %v534
    %v558 = vadd.f32 %v435, %v537
    %v559 = vadd.f32 %v437, %v539
    %v560 = vadd.f32 %v440, %v542
    %v561 = vadd.f32 %v442, %v544
    %v562 = vperm.slane %v79, 0
    %v563 = vmul.f32 %v181, %v562
    %v564 = vmul.f32 %v186, %v562
    %v565 = vmul.f32 %v191, %v562
    %v566 = vmul.f32 %v196, %v562
    %v567 = vmul.f32 %v201, %v562
    %v568 = vmul.f32 %v206, %v562
    %v569 = vmul.f32 %v211, %v562
    %v570 = vmul.f32 %v216, %v562
    %v571 = vmul.f32 %v221, %v562
    %v572 = vmul.f32 %v226, %v562
    %v573 = vmul.f32 %v231, %v562
    %v574 = vmul.f32 %v236, %v562
    %v575 = vmul.f32 %v241, %v562
    %v576 = vmul.f32 %v246, %v562
    %v577 = vmul.f32 %v251, %v562
    %v578 = vmul.f32 %v256, %v562
    %v579 = vadd.f32 %v546, %v563
    %v580 = vadd.f32 %v547, %v564
    %v581 = vadd.f32 %v548, %v565
    %v582 = vadd.f32 %v549, %v566
    %v583 = vadd.f32 %v550, %v567
    %v584 = vadd.f32 %v551, %v568
    %v585 = vadd.f32 %v552, %v569
    %v586 = vadd.f32 %v553, %v570
    %v587 = vadd.f32 %v554, %v571
    %v588 = vadd.f32 %v555, %v572
    %v589 = vadd.f32 %v556, %v573
    %v590 = vadd.f32 %v557, %v574
    %v591 = vadd.f32 %v558, %v575
    %v592 = vadd.f32 %v559, %v576
    %v593 = vadd.f32 %v560, %v577
    %v594 = vadd.f32 %v561, %v578
    %v595 = vmax.f32 %v579, 0.0
    %v596 = vmax.f32 %v580, 0.0
    %v597 = vmax.f32 %v581, 0.0
    %v598 = vmax.f32 %v582, 0.0
    %v599 = vmax.f32 %v583, 0.0
    %v600 = vmax.f32 %v584, 0.0
    %v601 = vmax.f32 %v585, 0.0
    %v602 = vmax.f32 %v586, 0.0
    %v603 = vmax.f32 %v587, 0.0
    %v604 = vmax.f32 %v588, 0.0
    %v605 = vmax.f32 %v589, 0.0
    %v606 = vmax.f32 %v590, 0.0
    %v607 = vmax.f32 %v591, 0.0
    %v608 = vmax.f32 %v592, 0.0
    %v609 = vmax.f32 %v593, 0.0
    %v610 = vmax.f32 %v594, 0.0
    %v611 = vperm.slane %v80, 0
    %v612 = vmul.f32 %v595, %v611
    %v613 = vmul.f32 %v596, %v611
    %v614 = vmul.f32 %v597, %v611
    %v615 = vmul.f32 %v598, %v611
    %v616 = vmul.f32 %v599, %v611
    %v617 = vmul.f32 %v600, %v611
    %v618 = vmul.f32 %v601, %v611
    %v619 = vmul.f32 %v602, %v611
    %v620 = vmul.f32 %v603, %v611
    %v621 = vmul.f32 %v604, %v611
    %v622 = vmul.f32 %v605, %v611
    %v623 = vmul.f32 %v606, %v611
    %v624 = vmul.f32 %v607, %v611
    %v625 = vmul.f32 %v608, %v611
    %v626 = vmul.f32 %v609, %v611
    %v627 = vmul.f32 %v610, %v611
    %v628 = vperm.slane %v80, 1
    %v629 = vadd.f32 %v612, %v628
    %v630 = vadd.f32 %v613, %v628
    %v631 = vadd.f32 %v614, %v628
    %v632 = vadd.f32 %v615, %v628
    %v633 = vadd.f32 %v616, %v628
    %v634 = vadd.f32 %v617, %v628
    %v635 = vadd.f32 %v618, %v628
    %v636 = vadd.f32 %v619, %v628
    %v637 = vadd.f32 %v620, %v628
    %v638 = vadd.f32 %v621, %v628
    %v639 = vadd.f32 %v622, %v628
    %v640 = vadd.f32 %v623, %v628
    %v641 = vadd.f32 %v624, %v628
    %v642 = vadd.f32 %v625, %v628
    %v643 = vadd.f32 %v626, %v628
    %v644 = vadd.f32 %v627, %v628
    %v645 = vmax.f32 %v629, 0.0
    %v646 = vmax.f32 %v630, 0.0
    %v647 = vmax.f32 %v631, 0.0
    %v648 = vmax.f32 %v632, 0.0
    %v649 = vmax.f32 %v633, 0.0
    %v650 = vmax.f32 %v634, 0.0
    %v651 = vmax.f32 %v635, 0.0
    %v652 = vmax.f32 %v636, 0.0
    %v653 = vmax.f32 %v637, 0.0
    %v654 = vmax.f32 %v638, 0.0
    %v655 = vmax.f32 %v639, 0.0
    %v656 = vmax.f32 %v640, 0.0
    %v657 = vmax.f32 %v641, 0.0
    %v658 = vmax.f32 %v642, 0.0
    %v659 = vmax.f32 %v643, 0.0
    %v660 = vmax.f32 %v644, 0.0
    %v661 = vld [vmem:[#allocation2 + $0x28] sm:$0xff]
    %v662 = vld [vmem:[#allocation2 + $0x30] sm:$0xff]
    %v663 = vpack.c.bf16 %v662, %v661
    %v664 = vld [vmem:[#allocation2 + $0x38] sm:$0xff]
    %v665 = vld [vmem:[#allocation2 + $0x40] sm:$0xff]
    %v666 = vpack.c.bf16 %v665, %v664
    %v667 = vld [vmem:[#allocation2 + $0x48] sm:$0xf]
    %v668 = vpack.c.bf16 %v667, %v667
    %v669 = vld [vmem:[#allocation2 + $0x50] sm:$0x1]
    %v670 = vld [vmem:[#allocation2 + $0x58] sm:$0x3]
    %v671 = vpack.c.bf16 %v646, %v645
    %v672 = vpack.c.bf16 %v648, %v647
    %v673 = vpack.c.bf16 %v650, %v649
    %v674 = vpack.c.bf16 %v652, %v651
    %v675 = vpack.c.bf16 %v654, %v653
    %v676 = vpack.c.bf16 %v656, %v655
    %v677 = vpack.c.bf16 %v658, %v657
    %v678 = vpack.c.bf16 %v660, %v659
    %679 = vmatpush.bf16.msra.mxu0 %v678
    %680 = vmatpush.bf16.msra.mxu0 %v677
    %681 = vmatpush.bf16.msra.mxu0 %v676
    %682 = vmatpush.bf16.msra.mxu0 %v675
    %683 = vmatpush.bf16.msra.mxu0 %v674
    %684 = vmatpush.bf16.msra.mxu0 %v673
    %685 = vmatpush.bf16.msra.mxu0 %v672
    %686 = vmatpush.bf16.msra.mxu0 %v671
    %687 = vmatmul.bf16.gmra.mxu0 %v113
    %v688 = vpop.f32.mrf.mxu0
    %v689 = vadd.f32 0.0, %v688
    %v690 = vpop.f32.mrf.mxu0
    %v691 = vadd.f32 0.0, %v690
    %692 = vmatmul.bf16.gmra.mxu0 %v114
    %v693 = vpop.f32.mrf.mxu0
    %v694 = vadd.f32 0.0, %v693
    %v695 = vpop.f32.mrf.mxu0
    %v696 = vadd.f32 0.0, %v695
    %697 = vmatmul.bf16.gmra.mxu0 %v115
    %v698 = vpop.f32.mrf.mxu0
    %v699 = vadd.f32 0.0, %v698
    %v700 = vpop.f32.mrf.mxu0
    %v701 = vadd.f32 0.0, %v700
    %702 = vmatmul.bf16.gmra.mxu0 %v116
    %v703 = vpop.f32.mrf.mxu0
    %v704 = vadd.f32 0.0, %v703
    %v705 = vpop.f32.mrf.mxu0
    %v706 = vadd.f32 0.0, %v705
    %707 = vmatmul.bf16.gmra.mxu0 %v117
    %v708 = vpop.f32.mrf.mxu0
    %v709 = vadd.f32 0.0, %v708
    %v710 = vpop.f32.mrf.mxu0
    %v711 = vadd.f32 0.0, %v710
    %712 = vmatmul.bf16.gmra.mxu0 %v118
    %v713 = vpop.f32.mrf.mxu0
    %v714 = vadd.f32 0.0, %v713
    %v715 = vpop.f32.mrf.mxu0
    %v716 = vadd.f32 0.0, %v715
    %717 = vmatmul.bf16.gmra.mxu0 %v119
    %v718 = vpop.f32.mrf.mxu0
    %v719 = vadd.f32 0.0, %v718
    %v720 = vpop.f32.mrf.mxu0
    %v721 = vadd.f32 0.0, %v720
    %722 = vmatmul.bf16.gmra.mxu0 %v120
    %v723 = vpop.f32.mrf.mxu0
    %v724 = vadd.f32 0.0, %v723
    %v725 = vpop.f32.mrf.mxu0
    %v726 = vadd.f32 0.0, %v725
    %727 = vdwg.mxu0
    %v728 = vmul.f32 %v181, %v645
    %v729 = vmul.f32 %v186, %v646
    %v730 = vmul.f32 %v191, %v647
    %v731 = vmul.f32 %v196, %v648
    %v732 = vmul.f32 %v201, %v649
    %v733 = vmul.f32 %v206, %v650
    %v734 = vmul.f32 %v211, %v651
    %v735 = vmul.f32 %v216, %v652
    %v736 = vmul.f32 %v221, %v653
    %v737 = vmul.f32 %v226, %v654
    %v738 = vmul.f32 %v231, %v655
    %v739 = vmul.f32 %v236, %v656
    %v740 = vmul.f32 %v241, %v657
    %v741 = vmul.f32 %v246, %v658
    %v742 = vmul.f32 %v251, %v659
    %v743 = vmul.f32 %v256, %v660
    %v744 = vpack.c.bf16 %v729, %v728
    %v745 = vpack.c.bf16 %v731, %v730
    %v746 = vpack.c.bf16 %v733, %v732
    %v747 = vpack.c.bf16 %v735, %v734
    %v748 = vpack.c.bf16 %v737, %v736
    %v749 = vpack.c.bf16 %v739, %v738
    %v750 = vpack.c.bf16 %v741, %v740
    %v751 = vpack.c.bf16 %v743, %v742
    %v752 = vpack.c.bf16 %v691, %v689
    %v753 = vpack.c.bf16 %v696, %v694
    %v754 = vpack.c.bf16 %v701, %v699
    %v755 = vpack.c.bf16 %v706, %v704
    %v756 = vpack.c.bf16 %v711, %v709
    %v757 = vpack.c.bf16 %v716, %v714
    %v758 = vpack.c.bf16 %v721, %v719
    %v759 = vpack.c.bf16 %v726, %v724
    %vm760 = vcmask 130048
    %v762 = vsel %vm760, %v752, 0
    %v765 = vsel %vm760, %v753, 0
    %v768 = vsel %vm760, %v754, 0
    %v771 = vsel %vm760, %v755, 0
    %v774 = vsel %vm760, %v756, 0
    %v777 = vsel %vm760, %v757, 0
    %v780 = vsel %vm760, %v758, 0
    %v783 = vsel %vm760, %v759, 0
    %785 = vmatpush.bf16.msra.mxu0 0
    %786 = vmatpush.bf16.msra.mxu0 0
    %787 = vmatpush.bf16.msra.mxu0 0
    %788 = vmatpush.bf16.msra.mxu0 0
    %789 = vmatpush.bf16.msra.mxu0 0
    %790 = vmatpush.bf16.msra.mxu0 0
    %791 = vmatpush.bf16.msra.mxu0 0
    %792 = vmatpush.bf16.msra.mxu0 %v666
    %793 = vmatmul.bf16.gmra.mxu0 %v762
    %v794 = vpop.f32.mrf.mxu0
    %v795 = vadd.f32 0.0, %v794
    %v796 = vpop.f32.mrf.mxu0
    %v797 = vadd.f32 0.0, %v796
    %798 = vmatmul.bf16.gmra.mxu0 %v765
    %v799 = vpop.f32.mrf.mxu0
    %v800 = vadd.f32 0.0, %v799
    %v801 = vpop.f32.mrf.mxu0
    %v802 = vadd.f32 0.0, %v801
    %803 = vmatmul.bf16.gmra.mxu0 %v768
    %v804 = vpop.f32.mrf.mxu0
    %v805 = vadd.f32 0.0, %v804
    %v806 = vpop.f32.mrf.mxu0
    %v807 = vadd.f32 0.0, %v806
    %808 = vmatmul.bf16.gmra.mxu0 %v771
    %v809 = vpop.f32.mrf.mxu0
    %v810 = vadd.f32 0.0, %v809
    %v811 = vpop.f32.mrf.mxu0
    %v812 = vadd.f32 0.0, %v811
    %813 = vmatmul.bf16.gmra.mxu0 %v774
    %v814 = vpop.f32.mrf.mxu0
    %v815 = vadd.f32 0.0, %v814
    %v816 = vpop.f32.mrf.mxu0
    %v817 = vadd.f32 0.0, %v816
    %818 = vmatmul.bf16.gmra.mxu0 %v777
    %v819 = vpop.f32.mrf.mxu0
    %v820 = vadd.f32 0.0, %v819
    %v821 = vpop.f32.mrf.mxu0
    %v822 = vadd.f32 0.0, %v821
    %823 = vmatmul.bf16.gmra.mxu0 %v780
    %v824 = vpop.f32.mrf.mxu0
    %v825 = vadd.f32 0.0, %v824
    %v826 = vpop.f32.mrf.mxu0
    %v827 = vadd.f32 0.0, %v826
    %828 = vmatmul.bf16.gmra.mxu0 %v783
    %v829 = vpop.f32.mrf.mxu0
    %v830 = vadd.f32 0.0, %v829
    %v831 = vpop.f32.mrf.mxu0
    %v832 = vadd.f32 0.0, %v831
    %833 = vdwg.mxu0
    %v835 = vsel %vm760, %v744, 0
    %v838 = vsel %vm760, %v745, 0
    %v841 = vsel %vm760, %v746, 0
    %v844 = vsel %vm760, %v747, 0
    %v847 = vsel %vm760, %v748, 0
    %v850 = vsel %vm760, %v749, 0
    %v853 = vsel %vm760, %v750, 0
    %v856 = vsel %vm760, %v751, 0
    %858 = vmatpush.bf16.msra.mxu0 0
    %859 = vmatpush.bf16.msra.mxu0 0
    %860 = vmatpush.bf16.msra.mxu0 0
    %861 = vmatpush.bf16.msra.mxu0 0
    %862 = vmatpush.bf16.msra.mxu0 0
    %863 = vmatpush.bf16.msra.mxu0 0
    %864 = vmatpush.bf16.msra.mxu0 0
    %865 = vmatpush.bf16.msra.mxu0 %v663
    %866 = vmatmul.bf16.gmra.mxu0 %v835
    %v867 = vpop.f32.mrf.mxu0
    %v868 = vadd.f32 %v795, %v867
    %v869 = vpop.f32.mrf.mxu0
    %v870 = vadd.f32 %v797, %v869
    %871 = vmatmul.bf16.gmra.mxu0 %v838
    %v872 = vpop.f32.mrf.mxu0
    %v873 = vadd.f32 %v800, %v872
    %v874 = vpop.f32.mrf.mxu0
    %v875 = vadd.f32 %v802, %v874
    %876 = vmatmul.bf16.gmra.mxu0 %v841
    %v877 = vpop.f32.mrf.mxu0
    %v878 = vadd.f32 %v805, %v877
    %v879 = vpop.f32.mrf.mxu0
    %v880 = vadd.f32 %v807, %v879
    %881 = vmatmul.bf16.gmra.mxu0 %v844
    %v882 = vpop.f32.mrf.mxu0
    %v883 = vadd.f32 %v810, %v882
    %v884 = vpop.f32.mrf.mxu0
    %v885 = vadd.f32 %v812, %v884
    %886 = vmatmul.bf16.gmra.mxu0 %v847
    %v887 = vpop.f32.mrf.mxu0
    %v888 = vadd.f32 %v815, %v887
    %v889 = vpop.f32.mrf.mxu0
    %v890 = vadd.f32 %v817, %v889
    %891 = vmatmul.bf16.gmra.mxu0 %v850
    %v892 = vpop.f32.mrf.mxu0
    %v893 = vadd.f32 %v820, %v892
    %v894 = vpop.f32.mrf.mxu0
    %v895 = vadd.f32 %v822, %v894
    %896 = vmatmul.bf16.gmra.mxu0 %v853
    %v897 = vpop.f32.mrf.mxu0
    %v898 = vadd.f32 %v825, %v897
    %v899 = vpop.f32.mrf.mxu0
    %v900 = vadd.f32 %v827, %v899
    %901 = vmatmul.bf16.gmra.mxu0 %v856
    %v902 = vpop.f32.mrf.mxu0
    %v903 = vadd.f32 %v830, %v902
    %v904 = vpop.f32.mrf.mxu0
    %v905 = vadd.f32 %v832, %v904
    %906 = vdwg.mxu0
    %v908 = vsel %vm493, %v668, 0
    %910 = vmatpush.bf16.msra.mxu0 0
    %911 = vmatpush.bf16.msra.mxu0 0
    %912 = vmatpush.bf16.msra.mxu0 0
    %913 = vmatpush.bf16.msra.mxu0 0
    %914 = vmatpush.bf16.msra.mxu0 0
    %915 = vmatpush.bf16.msra.mxu0 0
    %916 = vmatpush.bf16.msra.mxu0 0
    %917 = vmatpush.bf16.msra.mxu0 %v908
    %918 = vmatmul.bf16.gmra.mxu0 %v470
    %v919 = vpop.f32.mrf.mxu0
    %v920 = vadd.f32 0.0, %v919
    %v921 = vpop.f32.mrf.mxu0
    %v922 = vadd.f32 0.0, %v921
    %923 = vmatmul.bf16.gmra.mxu0 %v473
    %v924 = vpop.f32.mrf.mxu0
    %v925 = vadd.f32 0.0, %v924
    %v926 = vpop.f32.mrf.mxu0
    %v927 = vadd.f32 0.0, %v926
    %928 = vmatmul.bf16.gmra.mxu0 %v476
    %v929 = vpop.f32.mrf.mxu0
    %v930 = vadd.f32 0.0, %v929
    %v931 = vpop.f32.mrf.mxu0
    %v932 = vadd.f32 0.0, %v931
    %933 = vmatmul.bf16.gmra.mxu0 %v479
    %v934 = vpop.f32.mrf.mxu0
    %v935 = vadd.f32 0.0, %v934
    %v936 = vpop.f32.mrf.mxu0
    %v937 = vadd.f32 0.0, %v936
    %938 = vmatmul.bf16.gmra.mxu0 %v482
    %v939 = vpop.f32.mrf.mxu0
    %v940 = vadd.f32 0.0, %v939
    %v941 = vpop.f32.mrf.mxu0
    %v942 = vadd.f32 0.0, %v941
    %943 = vmatmul.bf16.gmra.mxu0 %v485
    %v944 = vpop.f32.mrf.mxu0
    %v945 = vadd.f32 0.0, %v944
    %v946 = vpop.f32.mrf.mxu0
    %v947 = vadd.f32 0.0, %v946
    %948 = vmatmul.bf16.gmra.mxu0 %v488
    %v949 = vpop.f32.mrf.mxu0
    %v950 = vadd.f32 0.0, %v949
    %v951 = vpop.f32.mrf.mxu0
    %v952 = vadd.f32 0.0, %v951
    %953 = vmatmul.bf16.gmra.mxu0 %v491
    %v954 = vpop.f32.mrf.mxu0
    %v955 = vadd.f32 0.0, %v954
    %v956 = vpop.f32.mrf.mxu0
    %v957 = vadd.f32 0.0, %v956
    %958 = vdwg.mxu0
    %v959 = vadd.f32 %v868, %v920
    %v960 = vadd.f32 %v870, %v922
    %v961 = vadd.f32 %v873, %v925
    %v962 = vadd.f32 %v875, %v927
    %v963 = vadd.f32 %v878, %v930
    %v964 = vadd.f32 %v880, %v932
    %v965 = vadd.f32 %v883, %v935
    %v966 = vadd.f32 %v885, %v937
    %v967 = vadd.f32 %v888, %v940
    %v968 = vadd.f32 %v890, %v942
    %v969 = vadd.f32 %v893, %v945
    %v970 = vadd.f32 %v895, %v947
    %v971 = vadd.f32 %v898, %v950
    %v972 = vadd.f32 %v900, %v952
    %v973 = vadd.f32 %v903, %v955
    %v974 = vadd.f32 %v905, %v957
    %v975 = vperm.slane %v669, 0
    %v976 = vmul.f32 %v181, %v975
    %v977 = vmul.f32 %v186, %v975
    %v978 = vmul.f32 %v191, %v975
    %v979 = vmul.f32 %v196, %v975
    %v980 = vmul.f32 %v201, %v975
    %v981 = vmul.f32 %v206, %v975
    %v982 = vmul.f32 %v211, %v975
    %v983 = vmul.f32 %v216, %v975
    %v984 = vmul.f32 %v221, %v975
    %v985 = vmul.f32 %v226, %v975
    %v986 = vmul.f32 %v231, %v975
    %v987 = vmul.f32 %v236, %v975
    %v988 = vmul.f32 %v241, %v975
    %v989 = vmul.f32 %v246, %v975
    %v990 = vmul.f32 %v251, %v975
    %v991 = vmul.f32 %v256, %v975
    %v992 = vadd.f32 %v959, %v976
    %v993 = vadd.f32 %v960, %v977
    %v994 = vadd.f32 %v961, %v978
    %v995 = vadd.f32 %v962, %v979
    %v996 = vadd.f32 %v963, %v980
    %v997 = vadd.f32 %v964, %v981
    %v998 = vadd.f32 %v965, %v982
    %v999 = vadd.f32 %v966, %v983
    %v1000 = vadd.f32 %v967, %v984
    %v1001 = vadd.f32 %v968, %v985
    %v1002 = vadd.f32 %v969, %v986
    %v1003 = vadd.f32 %v970, %v987
    %v1004 = vadd.f32 %v971, %v988
    %v1005 = vadd.f32 %v972, %v989
    %v1006 = vadd.f32 %v973, %v990
    %v1007 = vadd.f32 %v974, %v991
    %v1008 = vmax.f32 %v992, 0.0
    %v1009 = vmax.f32 %v993, 0.0
    %v1010 = vmax.f32 %v994, 0.0
    %v1011 = vmax.f32 %v995, 0.0
    %v1012 = vmax.f32 %v996, 0.0
    %v1013 = vmax.f32 %v997, 0.0
    %v1014 = vmax.f32 %v998, 0.0
    %v1015 = vmax.f32 %v999, 0.0
    %v1016 = vmax.f32 %v1000, 0.0
    %v1017 = vmax.f32 %v1001, 0.0
    %v1018 = vmax.f32 %v1002, 0.0
    %v1019 = vmax.f32 %v1003, 0.0
    %v1020 = vmax.f32 %v1004, 0.0
    %v1021 = vmax.f32 %v1005, 0.0
    %v1022 = vmax.f32 %v1006, 0.0
    %v1023 = vmax.f32 %v1007, 0.0
    %v1024 = vperm.slane %v670, 0
    %v1025 = vmul.f32 %v1008, %v1024
    %v1026 = vmul.f32 %v1009, %v1024
    %v1027 = vmul.f32 %v1010, %v1024
    %v1028 = vmul.f32 %v1011, %v1024
    %v1029 = vmul.f32 %v1012, %v1024
    %v1030 = vmul.f32 %v1013, %v1024
    %v1031 = vmul.f32 %v1014, %v1024
    %v1032 = vmul.f32 %v1015, %v1024
    %v1033 = vmul.f32 %v1016, %v1024
    %v1034 = vmul.f32 %v1017, %v1024
    %v1035 = vmul.f32 %v1018, %v1024
    %v1036 = vmul.f32 %v1019, %v1024
    %v1037 = vmul.f32 %v1020, %v1024
    %v1038 = vmul.f32 %v1021, %v1024
    %v1039 = vmul.f32 %v1022, %v1024
    %v1040 = vmul.f32 %v1023, %v1024
    %v1041 = vperm.slane %v670, 1
    %v1042 = vadd.f32 %v1025, %v1041
    %v1043 = vadd.f32 %v1026, %v1041
    %v1044 = vadd.f32 %v1027, %v1041
    %v1045 = vadd.f32 %v1028, %v1041
    %v1046 = vadd.f32 %v1029, %v1041
    %v1047 = vadd.f32 %v1030, %v1041
    %v1048 = vadd.f32 %v1031, %v1041
    %v1049 = vadd.f32 %v1032, %v1041
    %v1050 = vadd.f32 %v1033, %v1041
    %v1051 = vadd.f32 %v1034, %v1041
    %v1052 = vadd.f32 %v1035, %v1041
    %v1053 = vadd.f32 %v1036, %v1041
    %v1054 = vadd.f32 %v1037, %v1041
    %v1055 = vadd.f32 %v1038, %v1041
    %v1056 = vadd.f32 %v1039, %v1041
    %v1057 = vadd.f32 %v1040, %v1041
    %v1058 = vmax.f32 %v1042, 0.0
    %v1059 = vmax.f32 %v1043, 0.0
    %v1060 = vmax.f32 %v1044, 0.0
    %v1061 = vmax.f32 %v1045, 0.0
    %v1062 = vmax.f32 %v1046, 0.0
    %v1063 = vmax.f32 %v1047, 0.0
    %v1064 = vmax.f32 %v1048, 0.0
    %v1065 = vmax.f32 %v1049, 0.0
    %v1066 = vmax.f32 %v1050, 0.0
    %v1067 = vmax.f32 %v1051, 0.0
    %v1068 = vmax.f32 %v1052, 0.0
    %v1069 = vmax.f32 %v1053, 0.0
    %v1070 = vmax.f32 %v1054, 0.0
    %v1071 = vmax.f32 %v1055, 0.0
    %v1072 = vmax.f32 %v1056, 0.0
    %v1073 = vmax.f32 %v1057, 0.0
    %v1074 = vpack.c.bf16 %v1059, %v1058
    %v1075 = vpack.c.bf16 %v1061, %v1060
    %v1076 = vpack.c.bf16 %v1063, %v1062
    %v1077 = vpack.c.bf16 %v1065, %v1064
    %v1078 = vpack.c.bf16 %v1067, %v1066
    %v1079 = vpack.c.bf16 %v1069, %v1068
    %v1080 = vpack.c.bf16 %v1071, %v1070
    %v1081 = vpack.c.bf16 %v1073, %v1072
    %1082 = vmatpush.bf16.msra.mxu0 %v1081
    %1083 = vmatpush.bf16.msra.mxu0 %v1080
    %1084 = vmatpush.bf16.msra.mxu0 %v1079
    %1085 = vmatpush.bf16.msra.mxu0 %v1078
    %1086 = vmatpush.bf16.msra.mxu0 %v1077
    %1087 = vmatpush.bf16.msra.mxu0 %v1076
    %1088 = vmatpush.bf16.msra.mxu0 %v1075
    %1089 = vmatpush.bf16.msra.mxu0 %v1074
    %1090 = vmatmul.bf16.gmra.mxu0 %v64
    %v1091 = vpop.f32.mrf.mxu0
    %v1092 = vadd.f32 0.0, %v1091
    %v1093 = vpop.f32.mrf.mxu0
    %1094 = vdwg.mxu0
    %v1095 = vld [vmem:[#allocation2 + $0xb0] sm:$0xff]
    %v1096 = vld [vmem:[#allocation2 + $0x60] sm:$0xff]
    %v1097 = vld [vmem:[#allocation2 + $0x68] sm:$0xff]
    %v1098 = vpack.c.bf16 %v1097, %v1096
    %v1099 = vld [vmem:[#allocation2 + $0x70] sm:$0xff]
    %v1100 = vld [vmem:[#allocation2 + $0x78] sm:$0x1]
    %v1101 = vpack.c.bf16 %v1100, %v1099
    %v1102 = vld [vmem:[#allocation2 + $0x80] sm:$0x1]
    %v1103 = vpack.c.bf16 %v1092, %v1092
    %v1104 = vpack.c.bf16 %v1095, %v1095
    %vm1105 = vcmask 72704
    %v1107 = vsel %vm1105, %v1104, 0
    %vm1109 = vcmask 1044480
    %v1110 = vsel %vm315, 4294967295, 65535
    %v1111 = vsel %vm1109, %v1110, 0
    %v1113 = vand.u32 %v1101, %v1111
    %1115 = vmatpush.bf16.msra.mxu0 0
    %1116 = vmatpush.bf16.msra.mxu0 0
    %1117 = vmatpush.bf16.msra.mxu0 0
    %1118 = vmatpush.bf16.msra.mxu0 0
    %1119 = vmatpush.bf16.msra.mxu0 0
    %1120 = vmatpush.bf16.msra.mxu0 0
    %1121 = vmatpush.bf16.msra.mxu0 0
    %1122 = vmatpush.bf16.msra.mxu0 %v1113
    %1123 = vmatmul.bf16.gmra.mxu0 %v1107
    %v1124 = vpop.f32.mrf.mxu0
    %v1125 = vadd.f32 0.0, %v1124
    %v1126 = vpop.f32.mrf.mxu0
    %1127 = vdwg.mxu0
    %v1129 = vsel %vm760, %v1103, 0
    %1131 = vmatpush.bf16.msra.mxu0 0
    %1132 = vmatpush.bf16.msra.mxu0 0
    %1133 = vmatpush.bf16.msra.mxu0 0
    %1134 = vmatpush.bf16.msra.mxu0 0
    %1135 = vmatpush.bf16.msra.mxu0 0
    %1136 = vmatpush.bf16.msra.mxu0 0
    %1137 = vmatpush.bf16.msra.mxu0 0
    %1138 = vmatpush.bf16.msra.mxu0 %v1098
    %1139 = vmatmul.bf16.gmra.mxu0 %v1129
    %v1140 = vpop.f32.mrf.mxu0
    %v1141 = vadd.f32 %v1125, %v1140
    %v1142 = vpop.f32.mrf.mxu0
    %1143 = vdwg.mxu0
    %v1144 = vperm.slane %v1102, 0
    %v1145 = vadd.f32 %v1141, %v1144
    %v1146 = vmax.f32 %v1145, 0.0
    %v1147 = vld [vmem:[#allocation2 + $0x88] sm:$0xff]
    %v1148 = vld [vmem:[#allocation2 + $0x90] sm:$0xff]
    %v1149 = vld [vmem:[#allocation2 + $0x98] sm:$0xff]
    %v1150 = vld [vmem:[#allocation2 + $0xa0] sm:$0xff]
    %v1151 = vpack.c.bf16 %v1148, %v1147
    %v1152 = vpack.c.bf16 %v1150, %v1149
    %v1153 = vld [vmem:[#allocation2 + $0xa8] sm:$0x1]
    %v1154 = vpack.c.bf16 %v1146, %v1146
    %v1155 = vperm.slane %v1153, 0
    %vm1156 = vcmask 261120
    %v1158 = vsel %vm1156, %v1154, 0
    %1160 = vmatpush.bf16.msra.mxu0 0
    %1161 = vmatpush.bf16.msra.mxu0 0
    %1162 = vmatpush.bf16.msra.mxu0 0
    %1163 = vmatpush.bf16.msra.mxu0 0
    %1164 = vmatpush.bf16.msra.mxu0 0
    %1165 = vmatpush.bf16.msra.mxu0 0
    %1166 = vmatpush.bf16.msra.mxu0 %v1152
    %1167 = vmatpush.bf16.msra.mxu0 %v1151
    %1168 = vmatmul.bf16.gmra.mxu0 %v1158
    %v1169 = vpop.f32.mrf.mxu0
    %v1170 = vadd.f32 %v1155, %v1169
    %v1171 = vpop.f32.mrf.mxu0
    %1172 = vdwg.mxu0
    %1173 = vst [vmem:[#allocation5] sm:$0xff] %v1170
    // Predicated region
    $region18: #{tpu_custom_call.1} parent=1 // pred_check
      _
    $region19: #{tpu_custom_call.1} parent=1 // pred_check_branch
      %1175 = sbr.rel (0) target = $region21
    $region20: #{tpu_custom_call.1} parent=1 // pred_region
      %1177 = vsyncadd [#allocation4], 0
      %s1179 = sshll.u32 [#allocation5], 4
      %s1180 = int_to_ptr.vmem [resolvable:$true] %s1179
      %s1181 = sshll.u32 %s3, 4
      %s1182 = int_to_ptr.hbm [resolvable:$true] %s1181
      %1184 = dma.vmem_to_hbm [thread:$0]  %s1180, 128, %s1182, [#allocation4]
    $region21: #{tpu_custom_call.1} parent=1 // pred_fallthru
      _
    // Predicated region
    $region22: #{tpu_custom_call.1} parent=1 // pred_check
      _
    $region23: #{tpu_custom_call.1} parent=1 // pred_check_branch
      %1186 = sbr.rel (0) target = $region25
    $region24: #{tpu_custom_call.1} parent=1 // pred_region
      %1188 = dma.done [#allocation4], 128
    $region25: #{tpu_custom_call.1} parent=1 // pred_fallthru
      _
    %1189 = vsyncpa [#allocation3], 1
    %1190 = vsyncpa [#allocation4], 1

</llo_original>
